<compile_context>
chip_gen: v6e
topology: v6e:2x2x1
jax: 0.10.0
libtpu: 0.0.40
codegen_flags: <defaults>
</compile_context>

<pallas_src>
import functools

import jax
import jax.numpy as jnp
from jax.experimental import pallas as pl
from jax.experimental.pallas import tpu as pltpu


def _dice_kernel(pred_ref, tgt_ref, loss_ref, num_acc, den_acc, *, p, smooth):
    """Grid = (batch_tiles, feature_tiles); feature (reduction) axis is last."""
    k = pl.program_id(1)

    @pl.when(k == 0)
    def _init():
        num_acc[...] = jnp.zeros_like(num_acc)
        den_acc[...] = jnp.zeros_like(den_acc)

    # Upcast to f32 inside the kernel (inputs may be bf16 to halve HBM
    # traffic); accumulation always stays f32.
    pv = pred_ref[...].astype(jnp.float32)
    tv = tgt_ref[...].astype(jnp.float32)

    if p == 2:
        p_pow = pv * pv
        t_pow = tv * tv
    else:
        p_pow = pv ** p
        t_pow = tv ** p

    # Per-tile row reduce: bulk of the work is elementwise VPU adds combining
    # the tile's vregs, plus one cheap XLU lane-reduce finisher per quantity.
    # This is free filler under the HBM DMA (the kernel is memory bound) and
    # keeps the running state tiny.
    num_acc[...] += jnp.sum(pv * tv, axis=-1, keepdims=True)
    den_acc[...] += jnp.sum(p_pow + t_pow, axis=-1, keepdims=True)

    @pl.when(k == pl.num_programs(1) - 1)
    def _finalize():
        num = num_acc[...] + smooth
        den = den_acc[...] + smooth
        # Exact divide for the single per-batch scalar ratio.
        loss_ref[...] = (1.0 - num / den).astype(loss_ref.dtype)


def _round_up(x, m):
    return ((x + m - 1) // m) * m


def dice_loss(predict, target, p=2, smooth=1.0, reduction="mean",
              batch_tile=8, lane_tile=32768):
    """Pallas TPU implementation of DiceLoss.forward(predict, target)."""
    assert predict.shape[0] == target.shape[0], (
        "predict & target batch size don't match")
    B = predict.shape[0]

    pred2d = predict.reshape(B, -1)
    tgt2d = target.reshape(B, -1)
    N = pred2d.shape[1]

    # Tile sizes: (8,128)-aligned, or equal to the full (padded) dim.
    tb = batch_tile if B >= batch_tile else B
    B_pad = _round_up(B, tb)

    n_lane = _round_up(N, 128)
    tk = min(n_lane, lane_tile)
    N_pad = _round_up(n_lane, tk)

    if (B_pad, N_pad) != (B, N):
        pred2d = jnp.pad(pred2d, ((0, B_pad - B), (0, N_pad - N)))
        tgt2d = jnp.pad(tgt2d, ((0, B_pad - B), (0, N_pad - N)))

    grid = (B_pad // tb, N_pad // tk)

    kernel = functools.partial(_dice_kernel, p=p, smooth=float(smooth))

    per_batch = pl.pallas_call(
        kernel,
        out_shape=jax.ShapeDtypeStruct((B_pad, 1), jnp.float32),
        grid_spec=pltpu.PrefetchScalarGridSpec(
            num_scalar_prefetch=0,
            grid=grid,
            in_specs=[
                pl.BlockSpec((tb, tk), lambda i, k: (i, k)),
                pl.BlockSpec((tb, tk), lambda i, k: (i, k)),
            ],
            out_specs=pl.BlockSpec((tb, 1), lambda i, k: (i, 0)),
            scratch_shapes=[
                pltpu.VMEM((tb, 1), jnp.float32),  # running sum(p*t)
                pltpu.VMEM((tb, 1), jnp.float32),  # running sum(p^p + t^p)
            ],
        ),
        compiler_params=pltpu.CompilerParams(
            dimension_semantics=("parallel", "arbitrary"),
        ),
    )(pred2d, tgt2d)

    losses = per_batch[:B, 0]  # drop padded batch rows
    if reduction == "mean":
        return jnp.mean(losses)
    elif reduction == "sum":
        return jnp.sum(losses)
    elif reduction == "none":
        return losses
    else:
        raise ValueError("Unexpected reduction {}".format(reduction))


if __name__ == "__main__":
    key = jax.random.PRNGKey(0)
    k1, k2 = jax.random.split(key)

    # Small shapes consistent with a segmentation-style dice loss:
    # predict = per-pixel probabilities, target = binary mask.
    predict = jax.nn.sigmoid(
        jax.random.normal(k1, (2, 4, 16, 16), dtype=jnp.float32))
    target = (jax.random.uniform(k2, (2, 4, 16, 16)) > 0.5).astype(jnp.float32)

    loss = jax.jit(dice_loss)(predict, target)
    loss = jax.block_until_ready(loss)

    # Pure-JAX reference (matches the PyTorch module exactly).
    pf = predict.reshape(2, -1)
    tf = target.reshape(2, -1)
    num = jnp.sum(pf * tf, axis=1) + 1.0
    den = jnp.sum(pf * pf + tf * tf, axis=1) + 1.0
    ref = jnp.mean(1.0 - num / den)

    assert abs(float(loss) - float(ref)) < 1e-5, (float(loss), float(ref))
    print("KERNEL_OK")
</pallas_src>

<mosaic_0001>
module attributes {stable_mosaic.version = 11 : i64} {
  func.func @_dice_kernel(%arg0: i32, %arg1: i32, %arg2: memref<2x1024xf32, #tpu.memory_space<vmem>>, %arg3: memref<2x1024xf32, #tpu.memory_space<vmem>>, %arg4: memref<2x1xf32, #tpu.memory_space<vmem>>, %arg5: memref<2x1xf32, #tpu.memory_space<vmem>>, %arg6: memref<2x1xf32, #tpu.memory_space<vmem>>) attributes {dimension_semantics = [#tpu.dimension_semantics<parallel>, #tpu.dimension_semantics<arbitrary>], iteration_bounds = array<i64: 1, 1>, scalar_prefetch = 0 : i64, scratch_operands = 2 : i64, tpu.core_type = #tpu.core_type<tc>, window_params = [{transform_indices = @transform_0, window_bounds = array<i64: 2, 1024>}, {transform_indices = @transform_1, window_bounds = array<i64: 2, 1024>}, {transform_indices = @transform_2, window_bounds = array<i64: 2, 1>}]} {
    %c0_i32 = arith.constant 0 : i32
    %0 = arith.cmpi eq, %arg1, %c0_i32 : i32
    %1 = arith.extui %0 : i1 to i32
    %c0_i32_0 = arith.constant 0 : i32
    %2 = arith.cmpi ne, %1, %c0_i32_0 : i32
    scf.if %2 {
      %cst_15 = arith.constant 0.000000e+00 : f32
      %22 = vector.broadcast %cst_15 : f32 to vector<2x1xf32>
      %c0_16 = arith.constant 0 : index
      %c0_17 = arith.constant 0 : index
      %23 = vector.load %arg5[%c0_16, %c0_17] : memref<2x1xf32, #tpu.memory_space<vmem>>, vector<2x1xf32>
      tpu.vector_store %arg5[%c0_16, %c0_17], %22 {strides = array<i32>} : memref<2x1xf32, #tpu.memory_space<vmem>>, vector<2x1xf32>,
      %cst_18 = arith.constant 0.000000e+00 : f32
      %24 = vector.broadcast %cst_18 : f32 to vector<2x1xf32>
      %c0_19 = arith.constant 0 : index
      %c0_20 = arith.constant 0 : index
      %25 = vector.load %arg6[%c0_19, %c0_20] : memref<2x1xf32, #tpu.memory_space<vmem>>, vector<2x1xf32>
      tpu.vector_store %arg6[%c0_19, %c0_20], %24 {strides = array<i32>} : memref<2x1xf32, #tpu.memory_space<vmem>>, vector<2x1xf32>,
    } else {
    }
    %c0 = arith.constant 0 : index
    %c0_1 = arith.constant 0 : index
    %3 = vector.load %arg2[%c0, %c0_1] : memref<2x1024xf32, #tpu.memory_space<vmem>>, vector<2x1024xf32>
    %c0_2 = arith.constant 0 : index
    %c0_3 = arith.constant 0 : index
    %4 = vector.load %arg3[%c0_2, %c0_3] : memref<2x1024xf32, #tpu.memory_space<vmem>>, vector<2x1024xf32>
    %5 = arith.mulf %3, %3 : vector<2x1024xf32>
    %6 = arith.mulf %4, %4 : vector<2x1024xf32>
    %c0_4 = arith.constant 0 : index
    %c0_5 = arith.constant 0 : index
    %7 = vector.load %arg5[%c0_4, %c0_5] : memref<2x1xf32, #tpu.memory_space<vmem>>, vector<2x1xf32>
    %8 = arith.mulf %3, %4 : vector<2x1024xf32>
    %cst = arith.constant dense<0.000000e+00> : vector<2xf32>
    %9 = vector.multi_reduction <add>, %8, %cst [1] : vector<2x1024xf32> to vector<2xf32>
    %10 = vector.shape_cast %9 : vector<2xf32> to vector<2x1xf32>
    %11 = arith.addf %7, %10 : vector<2x1xf32>
    %c0_6 = arith.constant 0 : index
    %c0_7 = arith.constant 0 : index
    %12 = vector.load %arg5[%c0_6, %c0_7] : memref<2x1xf32, #tpu.memory_space<vmem>>, vector<2x1xf32>
    tpu.vector_store %arg5[%c0_6, %c0_7], %11 {strides = array<i32>} : memref<2x1xf32, #tpu.memory_space<vmem>>, vector<2x1xf32>,
    %c0_8 = arith.constant 0 : index
    %c0_9 = arith.constant 0 : index
    %13 = vector.load %arg6[%c0_8, %c0_9] : memref<2x1xf32, #tpu.memory_space<vmem>>, vector<2x1xf32>
    %14 = arith.addf %5, %6 : vector<2x1024xf32>
    %cst_10 = arith.constant dense<0.000000e+00> : vector<2xf32>
    %15 = vector.multi_reduction <add>, %14, %cst_10 [1] : vector<2x1024xf32> to vector<2xf32>
    %16 = vector.shape_cast %15 : vector<2xf32> to vector<2x1xf32>
    %17 = arith.addf %13, %16 : vector<2x1xf32>
    %c0_11 = arith.constant 0 : index
    %c0_12 = arith.constant 0 : index
    %18 = vector.load %arg6[%c0_11, %c0_12] : memref<2x1xf32, #tpu.memory_space<vmem>>, vector<2x1xf32>
    tpu.vector_store %arg6[%c0_11, %c0_12], %17 {strides = array<i32>} : memref<2x1xf32, #tpu.memory_space<vmem>>, vector<2x1xf32>,
    %c0_i32_13 = arith.constant 0 : i32
    %19 = arith.cmpi eq, %arg1, %c0_i32_13 : i32
    %20 = arith.extui %19 : i1 to i32
    %c0_i32_14 = arith.constant 0 : i32
    %21 = arith.cmpi ne, %20, %c0_i32_14 : i32
    scf.if %21 {
      %c0_15 = arith.constant 0 : index
      %c0_16 = arith.constant 0 : index
      %22 = vector.load %arg5[%c0_15, %c0_16] : memref<2x1xf32, #tpu.memory_space<vmem>>, vector<2x1xf32>
      %cst_17 = arith.constant 1.000000e+00 : f32
      %23 = vector.broadcast %cst_17 : f32 to vector<2x1xf32>
      %24 = arith.addf %22, %23 : vector<2x1xf32>
      %c0_18 = arith.constant 0 : index
      %c0_19 = arith.constant 0 : index
      %25 = vector.load %arg6[%c0_18, %c0_19] : memref<2x1xf32, #tpu.memory_space<vmem>>, vector<2x1xf32>
      %cst_20 = arith.constant 1.000000e+00 : f32
      %26 = vector.broadcast %cst_20 : f32 to vector<2x1xf32>
      %27 = arith.addf %25, %26 : vector<2x1xf32>
      %28 = arith.divf %24, %27 : vector<2x1xf32>
      %cst_21 = arith.constant 1.000000e+00 : f32
      %29 = vector.broadcast %cst_21 : f32 to vector<2x1xf32>
      %30 = arith.subf %29, %28 : vector<2x1xf32>
      %c0_22 = arith.constant 0 : index
      %c0_23 = arith.constant 0 : index
      %31 = vector.load %arg4[%c0_22, %c0_23] : memref<2x1xf32, #tpu.memory_space<vmem>>, vector<2x1xf32>
      tpu.vector_store %arg4[%c0_22, %c0_23], %30 {strides = array<i32>} : memref<2x1xf32, #tpu.memory_space<vmem>>, vector<2x1xf32>,
    } else {
    }
    return
  }
  func.func @transform_0(%arg0: i32, %arg1: i32) -> (i32, i32) {
    %c0_i32 = arith.constant 0 : i32
    return %arg0, %arg1 : i32, i32
  }
  func.func @transform_1(%arg0: i32, %arg1: i32) -> (i32, i32) {
    %c0_i32 = arith.constant 0 : i32
    return %arg0, %arg1 : i32, i32
  }
  func.func @transform_2(%arg0: i32, %arg1: i32) -> (i32, i32) {
    %c0_i32 = arith.constant 0 : i32
    %c0_i32_0 = arith.constant 0 : i32
    return %arg0, %c0_i32 : i32, i32
  }
}

</mosaic_0001>

<llo_original>
// kernel: dice_loss.1
$region0: #{dice_loss.1}
  #allocation0 [shape = 'u32[]', space=smem, size = 0x4, offset = 0x4, fixed_abs, tag = 'smem constant byte address 0x4 - core index']
  #allocation1 [shape = 'u32[144,128]{1,0:T(1,128)}', space=vmem, size = 0x12000, scoped, tag = 'internal scratch']
  #allocation2 [shape = 'f32[2,1]{1,0:T(2,128)}', space=vmem, size = 0x400, scoped, tag = 'scratch operand']
  #allocation3 [shape = 'f32[2,1]{1,0:T(2,128)}', space=vmem, size = 0x400, scoped, tag = 'scratch operand']
  %s0 = inlined_call_operand.vmem [shape: f32[2,1024], index: 0, kind: input, shape index: {}]
  %s1 = inlined_call_operand.vmem [shape: f32[2,1024], index: 1, kind: input, shape index: {}]
  %s2 = inlined_call_operand.vmem [shape: f32[2,1], index: 2, kind: output, shape index: {}]
  %s3 = sld [smem:[#allocation0]]
  $region26: #{dice_loss.1} parent=0
    _
  %s5 = ssub.s32 1, %s3
  %s6 = scalar_select 0, %s5, %s3
  // Predicated region
  $region2: #{dice_loss.1} parent=0 // pred_check
    _
  $region3: #{dice_loss.1} parent=0 // pred_check_branch
    %8 = sbr.rel (0) target = $region5
  $region4: #{dice_loss.1} parent=0 // pred_region
    _
  $region5: #{dice_loss.1} parent=0 // pred_fallthru
    _
  // Predicated region
  $region6: #{dice_loss.1} parent=0 // pred_check
    _
  $region7: #{dice_loss.1} parent=0 // pred_check_branch
    %10 = sbr.rel (0) target = $region9
  $region8: #{dice_loss.1} parent=0 // pred_region
    _
  $region9: #{dice_loss.1} parent=0 // pred_fallthru
    _
  %p11 = scmp.eq.s32.totalorder 0, 0
  // Predicated region
  $region10: #{dice_loss.1} parent=0 // pred_check
    %p12 = pneg %p11
  $region11: #{dice_loss.1} parent=0 // pred_check_branch
    %14 = sbr.rel (%p12) target = $region13
  $region12: #{dice_loss.1} parent=0 // pred_region
    %vm15 = vcmask 1024
    %16 = vst.msk [vmem:[#allocation2] sm:$0x3] %vm15, 0.0
    %17 = vst.msk [vmem:[#allocation3] sm:$0x3] %vm15, 0.0
  $region13: #{dice_loss.1} parent=0 // pred_fallthru
    _
  %v18 = vld [vmem:[%s0] sm:$0xff]
  %v19 = vld [vmem:[%s0 + $0x8] sm:$0xff]
  %v20 = vld [vmem:[%s1] sm:$0xff]
  %v21 = vld [vmem:[%s1 + $0x8] sm:$0xff]
  %v22 = vmul.f32 %v18, %v18
  %v23 = vmul.f32 %v19, %v19
  %v24 = vmul.f32 %v20, %v20
  %v25 = vmul.f32 %v21, %v21
  %v26 = vld [vmem:[#allocation2] sm:$0x3]
  %v27 = vmul.f32 %v18, %v20
  %v28 = vmul.f32 %v19, %v21
  %v31 = vcombine.high %v27, %v27
  %v33 = vunpack.c.l.s4 1983009808
  %v34 = vunpack.c.0.s8 %v33
  %v35 = vlaneseq
  %v36 = vshrl.u32 %v35, 7
  %v37 = vsub.s32 %v34, %v36
  %v38 = vrot.slane %v27, %v37
  %v40 = vunpack.c.l.s4 1983009808
  %v41 = vunpack.c.0.s8 %v40
  %v42 = vlaneseq
  %v43 = vshrl.u32 %v42, 7
  %v44 = vsub.s32 %v41, %v43
  %v45 = vrot.slane %v31, %v44
  %v46 = vcombine.high %v38, %v38
  %v47 = vcombine.high %v45, %v45
  %v48 = vcombine.high %v28, %v28
  %v50 = vunpack.c.l.s4 1983009808
  %v51 = vunpack.c.0.s8 %v50
  %v52 = vlaneseq
  %v53 = vshrl.u32 %v52, 7
  %v54 = vsub.s32 %v51, %v53
  %v55 = vrot.slane %v28, %v54
  %v57 = vunpack.c.l.s4 1983009808
  %v58 = vunpack.c.0.s8 %v57
  %v59 = vlaneseq
  %v60 = vshrl.u32 %v59, 7
  %v61 = vsub.s32 %v58, %v60
  %v62 = vrot.slane %v48, %v61
  %v63 = vcombine.high %v55, %v55
  %v64 = vcombine.high %v62, %v62
  %vm73 = vcmask 1041408
  %v74 = vsel %vm73, %v38, 0.0
  %v75 = vsel %vm73, %v46, 0.0
  %v76 = vadd.f32 %v74, %v75
  %v77 = vsel %vm73, %v45, 0.0
  %v78 = vadd.f32 %v76, %v77
  %v79 = vsel %vm73, %v47, 0.0
  %v80 = vadd.f32 %v78, %v79
  %v81 = vsel %vm73, %v55, 0.0
  %v82 = vadd.f32 %v80, %v81
  %v83 = vsel %vm73, %v63, 0.0
  %v84 = vadd.f32 %v82, %v83
  %v85 = vsel %vm73, %v62, 0.0
  %v86 = vadd.f32 %v84, %v85
  %v87 = vsel %vm73, %v64, 0.0
  %v88 = vadd.f32 %v86, %v87
  %89 = vadd.xlane.f32.xlu0 %v88
  %v90 = vpop.xlane.xlu0 %89
  %v91 = vadd.f32 %v26, %v90
  %vm92 = vcmask 1024
  %93 = vst.msk [vmem:[#allocation2] sm:$0x3] %vm92, %v91
  %v94 = vld [vmem:[#allocation3] sm:$0x3]
  %v95 = vadd.f32 %v22, %v24
  %v96 = vadd.f32 %v23, %v25
  %v99 = vcombine.high %v95, %v95
  %v101 = vunpack.c.l.s4 1983009808
  %v102 = vunpack.c.0.s8 %v101
  %v103 = vlaneseq
  %v104 = vshrl.u32 %v103, 7
  %v105 = vsub.s32 %v102, %v104
  %v106 = vrot.slane %v95, %v105
  %v108 = vunpack.c.l.s4 1983009808
  %v109 = vunpack.c.0.s8 %v108
  %v110 = vlaneseq
  %v111 = vshrl.u32 %v110, 7
  %v112 = vsub.s32 %v109, %v111
  %v113 = vrot.slane %v99, %v112
  %v114 = vcombine.high %v106, %v106
  %v115 = vcombine.high %v113, %v113
  %v116 = vcombine.high %v96, %v96
  %v118 = vunpack.c.l.s4 1983009808
  %v119 = vunpack.c.0.s8 %v118
  %v120 = vlaneseq
  %v121 = vshrl.u32 %v120, 7
  %v122 = vsub.s32 %v119, %v121
  %v123 = vrot.slane %v96, %v122
  %v125 = vunpack.c.l.s4 1983009808
  %v126 = vunpack.c.0.s8 %v125
  %v127 = vlaneseq
  %v128 = vshrl.u32 %v127, 7
  %v129 = vsub.s32 %v126, %v128
  %v130 = vrot.slane %v116, %v129
  %v131 = vcombine.high %v123, %v123
  %v132 = vcombine.high %v130, %v130
  %v141 = vsel %vm73, %v106, 0.0
  %v142 = vsel %vm73, %v114, 0.0
  %v143 = vadd.f32 %v141, %v142
  %v144 = vsel %vm73, %v113, 0.0
  %v145 = vadd.f32 %v143, %v144
  %v146 = vsel %vm73, %v115, 0.0
  %v147 = vadd.f32 %v145, %v146
  %v148 = vsel %vm73, %v123, 0.0
  %v149 = vadd.f32 %v147, %v148
  %v150 = vsel %vm73, %v131, 0.0
  %v151 = vadd.f32 %v149, %v150
  %v152 = vsel %vm73, %v130, 0.0
  %v153 = vadd.f32 %v151, %v152
  %v154 = vsel %vm73, %v132, 0.0
  %v155 = vadd.f32 %v153, %v154
  %156 = vadd.xlane.f32.xlu0 %v155
  %v157 = vpop.xlane.xlu0 %156
  %v158 = vadd.f32 %v94, %v157
  %159 = vst.msk [vmem:[#allocation3] sm:$0x3] %vm92, %v158
  // Predicated region
  $region14: #{dice_loss.1} parent=0 // pred_check
    %p160 = pneg %p11
  $region15: #{dice_loss.1} parent=0 // pred_check_branch
    %162 = sbr.rel (%p160) target = $region17
  $region16: #{dice_loss.1} parent=0 // pred_region
    %v163 = vld [vmem:[#allocation2] sm:$0x3]
    %v164 = vadd.f32 %v163, 1.0
    %v165 = vld [vmem:[#allocation3] sm:$0x3]
    %v166 = vadd.f32 %v165, 1.0
    %v167 = vrcp.pop %v166
    %v168 = vmul.f32 %v164, %v167
    %v169 = vsub.f32 1.0, %v168
    %170 = vst.msk [vmem:[%s2] sm:$0x3] %vm92, %v169
  $region17: #{dice_loss.1} parent=0 // pred_fallthru
    _
  // Predicated region
  $region18: #{dice_loss.1} parent=0 // pred_check
    _
  $region19: #{dice_loss.1} parent=0 // pred_check_branch
    %172 = sbr.rel (0) target = $region21
  $region20: #{dice_loss.1} parent=0 // pred_region
    _
  $region21: #{dice_loss.1} parent=0 // pred_fallthru
    _
  // Predicated region
  $region22: #{dice_loss.1} parent=0 // pred_check
    _
  $region23: #{dice_loss.1} parent=0 // pred_check_branch
    %174 = sbr.rel (0) target = $region25
  $region24: #{dice_loss.1} parent=0 // pred_region
    _
  $region25: #{dice_loss.1} parent=0 // pred_fallthru
    _

</llo_original>
